<compile_context>
chip_gen: v5e
topology: v5e:2x2
jax: 0.10.0
libtpu: 0.0.40
codegen_flags: <defaults>
</compile_context>

<pallas_src>
import jax
import jax.numpy as jnp
from jax.experimental import pallas as pl
from jax.experimental.pallas import tpu as pltpu


def fm_kernel(stack_ref, w_ref, b_ref, q_ref, half_ref, sparse_ref, out_ref):
    s_in = sparse_ref[...]                          # (TB, F*E)  input dtype (bf16 or f32)
    stack = stack_ref[...].astype(jnp.float32)      # (TB, D)    widen for VPU (v5e: no bf16 VPU)
    s = s_in.astype(jnp.float32)                    # (TB, F*E)  f32 for elementwise
    b = b_ref[0, 0]                                 # scalar     f32 (SMEM)

    # Interaction quadratic form on the MXU (single pass when inputs are bf16; Q is exact 0/1):
    #   tmp[., f*E + e] = sum_f' s[., f'*E + e]   (field-sum broadcast back over fields)
    tmp = jnp.dot(s_in, q_ref[...], preferred_element_type=jnp.float32)      # (TB, F*E)

    prod = s * (tmp - s)                                                     # (TB, F*E) VPU, f32

    # Per-row reductions on the (mostly idle) MXU instead of the XLU:
    #   inter  = 0.5 * sum_lanes(prod)   == prod @ half_col   (half_col = 0.5)
    #   linear = sum_lanes(stack * w)    == stack @ w_col
    inter = jnp.dot(prod, half_ref[...], preferred_element_type=jnp.float32)   # (TB, 1)
    linear = jnp.dot(stack, w_ref[...], preferred_element_type=jnp.float32)    # (TB, 1)

    out_ref[...] = (linear + inter + b).astype(out_ref.dtype)


def _round_up(x, m):
    return (x + m - 1) // m * m


def fm_layer(stack, fc_weight, fc_bias, sparse, *, batch_tile=None,
             input_dtype=jnp.bfloat16):
    """stack: (B, D), fc_weight: (1, D), fc_bias: (1,), sparse: (B, F, E) -> (B, 1) f32."""
    B, D = stack.shape
    _, F, E = sparse.shape
    FE = F * E

    # ---- batch tile selection (mem/overhead bound: big tiles, but always >= 2 grid steps) ----
    if batch_tile is None:
        batch_tile = 2048          # ~86% of HBM roofline at >=1024; VMEM footprint is tiny
    tb = min(int(batch_tile), B)
    if tb >= B and B >= 16:
        # Guarantee at least 2 grid steps so v7x's two TensorCores both get work and the
        # double-buffered pipeline actually overlaps DMA with compute.
        tb = (B // 2) // 8 * 8
    if tb < B:
        tb = max(8, (tb // 8) * 8)  # keep the (8,128) block constraint happy
    else:
        tb = B                      # full-extent block is always legal
    grid = (pl.cdiv(B, tb),)

    # ---- operands ----
    in_dt = jnp.dtype(input_dtype)
    sparse_flat = sparse.reshape(B, FE).astype(in_dt)        # lane-dense, contiguous reshape
    stack_in = stack.astype(in_dt)

    # Q = P P^T with P[f*E+e, e'] = [e == e']  ->  Q[i, j] = [i % E == j % E]  (exact 0/1).
    idx = jnp.arange(FE)
    q = (idx[:, None] % E == idx[None, :] % E).astype(in_dt)          # (FE, FE)

    weight_col = jnp.asarray(fc_weight, jnp.float32).reshape(D, 1)    # (D, 1) for MXU reduce
    half_col = jnp.full((FE, 1), 0.5, dtype=jnp.float32)              # folds the 0.5
    bias2d = jnp.asarray(fc_bias, jnp.float32).reshape(1, 1)

    # ---- VMEM budget: 2 pipeline buffers x (tiles) + resident consts + f32 intermediates ----
    lane, sub = 128, 8
    in_bpe = in_dt.itemsize
    tb_p = _round_up(tb, sub)
    tile_bytes = (
        tb_p * _round_up(D, lane) * in_bpe          # stack tile
        + tb_p * _round_up(FE, lane) * in_bpe       # sparse tile
        + tb_p * lane * 4                           # out tile (lane padded), f32
    )
    const_bytes = (
        _round_up(FE, sub) * _round_up(FE, lane) * in_bpe   # Q
        + 2 * sub * lane * 4                                # w_col, half_col (padded)
    )
    interm_bytes = 4 * tb_p * _round_up(FE, lane) * 4       # tmp / prod / widened s, stack
    vmem_budget = 2 * tile_bytes + const_bytes + interm_bytes + (4 << 20)
    vmem_budget = int(min(max(vmem_budget, 32 << 20), 48 << 20))      # cap for v7x's 64 MiB

    return pl.pallas_call(
        fm_kernel,
        out_shape=jax.ShapeDtypeStruct((B, 1), jnp.float32),
        grid=grid,
        in_specs=[
            pl.BlockSpec((tb, D), lambda i: (i, 0)),                   # stack tile
            pl.BlockSpec((D, 1), lambda i: (0, 0)),                    # weight column (resident)
            pl.BlockSpec(memory_space=pltpu.MemorySpace.SMEM),         # bias scalar
            pl.BlockSpec((FE, FE), lambda i: (0, 0)),                  # Q (resident)
            pl.BlockSpec((FE, 1), lambda i: (0, 0)),                   # 0.5-column (resident)
            pl.BlockSpec((tb, FE), lambda i: (i, 0)),                  # sparse tile
        ],
        out_specs=pl.BlockSpec((tb, 1), lambda i: (i, 0)),
        compiler_params=pltpu.CompilerParams(
            dimension_semantics=("parallel",),
            vmem_limit_bytes=vmem_budget,
        ),
    )(stack_in, weight_col, bias2d, q, half_col, sparse_flat)


def fm_reference(stack, fc_weight, fc_bias, sparse):
    linear = stack @ fc_weight.T + fc_bias.reshape(1, 1)
    inter = jnp.sum(sparse, axis=1) ** 2 - jnp.sum(sparse ** 2, axis=1)
    inter = 0.5 * jnp.sum(inter, axis=-1, keepdims=True)
    return linear + inter


if __name__ == "__main__":
    # Small shapes consistent with the module's forward:
    #   stack: (B, concat_dim), sparse: (B, num_fields, embed_dim)
    B, concat_dim, num_fields, embed_dim = 256, 32, 8, 16

    key = jax.random.PRNGKey(0)
    k_stack, k_sparse, k_w = jax.random.split(key, 3)

    stack = jax.random.normal(k_stack, (B, concat_dim), dtype=jnp.float32)
    sparse = jax.random.normal(k_sparse, (B, num_fields, embed_dim), dtype=jnp.float32)

    # Deterministic params mimicking xavier_normal_ on fc.weight (shape (1, concat_dim)),
    # zero bias: fan_in = concat_dim, fan_out = 1 -> std = sqrt(2 / (concat_dim + 1)).
    xavier_std = jnp.sqrt(2.0 / (concat_dim + 1.0))
    fc_weight = xavier_std * jax.random.normal(k_w, (1, concat_dim), dtype=jnp.float32)
    fc_bias = jnp.zeros((1,), dtype=jnp.float32)

    # 1) Optimized bf16-input path (default). The only precision loss is the bf16 input cast,
    #    so validate against the f32 reference evaluated on the same bf16-rounded inputs.
    out_bf16 = jax.block_until_ready(fm_layer(stack, fc_weight, fc_bias, sparse))
    stack_q = stack.astype(jnp.bfloat16).astype(jnp.float32)
    sparse_q = sparse.astype(jnp.bfloat16).astype(jnp.float32)
    ref_q = fm_reference(stack_q, fc_weight, fc_bias, sparse_q)
    assert out_bf16.shape == (B, 1)
    assert jnp.allclose(out_bf16, ref_q, atol=1e-3, rtol=1e-3), (out_bf16, ref_q)

    # 2) Exact-precision path (f32 end-to-end) against the exact f32 reference.
    out_f32 = jax.block_until_ready(
        fm_layer(stack, fc_weight, fc_bias, sparse, input_dtype=jnp.float32))
    ref = fm_reference(stack, fc_weight, fc_bias, sparse)
    assert jnp.allclose(out_f32, ref, atol=1e-3, rtol=1e-3), (out_f32, ref)

    print("KERNEL_OK")
</pallas_src>

<mosaic_0001>
module attributes {stable_mosaic.version = 11 : i64} {
  func.func @fm_kernel(%arg0: i32, %arg1: memref<128x32xbf16, #tpu.memory_space<vmem>>, %arg2: memref<32x1xf32, #tpu.memory_space<vmem>>, %arg3: memref<1x1xf32, #tpu.memory_space<smem>>, %arg4: memref<128x128xbf16, #tpu.memory_space<vmem>>, %arg5: memref<128x1xf32, #tpu.memory_space<vmem>>, %arg6: memref<128x128xbf16, #tpu.memory_space<vmem>>, %arg7: memref<128x1xf32, #tpu.memory_space<vmem>>) attributes {dimension_semantics = [#tpu.dimension_semantics<parallel>], iteration_bounds = array<i64: 2>, scalar_prefetch = 0 : i64, scratch_operands = 0 : i64, tpu.core_type = #tpu.core_type<tc>, window_params = [{transform_indices = @transform_0, window_bounds = array<i64: 128, 32>}, {pipeline_mode = #tpu.pipeline_mode<synchronous>, transform_indices = @transform_1, window_bounds = array<i64: 32, 1>}, {transform_indices = @transform_2, window_bounds = array<i64: 1, 1>}, {pipeline_mode = #tpu.pipeline_mode<synchronous>, transform_indices = @transform_3, window_bounds = array<i64: 128, 128>}, {pipeline_mode = #tpu.pipeline_mode<synchronous>, transform_indices = @transform_4, window_bounds = array<i64: 128, 1>}, {transform_indices = @transform_5, window_bounds = array<i64: 128, 128>}, {transform_indices = @transform_6, window_bounds = array<i64: 128, 1>}]} {
    %c0 = arith.constant 0 : index
    %c0_0 = arith.constant 0 : index
    %0 = vector.load %arg6[%c0, %c0_0] : memref<128x128xbf16, #tpu.memory_space<vmem>>, vector<128x128xbf16>
    %c0_1 = arith.constant 0 : index
    %c0_2 = arith.constant 0 : index
    %1 = vector.load %arg1[%c0_1, %c0_2] : memref<128x32xbf16, #tpu.memory_space<vmem>>, vector<128x32xbf16>
    %2 = arith.extf %1 : vector<128x32xbf16> to vector<128x32xf32>
    %3 = arith.extf %0 : vector<128x128xbf16> to vector<128x128xf32>
    %c0_3 = arith.constant 0 : index
    %c0_4 = arith.constant 0 : index
    %4 = memref.load %arg3[%c0_3, %c0_4] : memref<1x1xf32, #tpu.memory_space<smem>>
    %c0_5 = arith.constant 0 : index
    %c0_6 = arith.constant 0 : index
    %5 = vector.load %arg4[%c0_5, %c0_6] : memref<128x128xbf16, #tpu.memory_space<vmem>>, vector<128x128xbf16>
    %cst = arith.constant dense<0.000000e+00> : vector<128x128xf32>
    %6 = tpu.matmul %0, %5, %cst {dimension_numbers = #tpu.dot_dimension_numbers<[1], [0], [0], [1], [0, 0, 1, 1], [], []>} : vector<128x128xbf16>, vector<128x128xbf16>, vector<128x128xf32> -> vector<128x128xf32>
    %7 = arith.subf %6, %3 : vector<128x128xf32>
    %8 = arith.mulf %3, %7 : vector<128x128xf32>
    %c0_7 = arith.constant 0 : index
    %c0_8 = arith.constant 0 : index
    %9 = vector.load %arg5[%c0_7, %c0_8] : memref<128x1xf32, #tpu.memory_space<vmem>>, vector<128x1xf32>
    %cst_9 = arith.constant dense<0.000000e+00> : vector<128x1xf32>
    %10 = tpu.matmul %8, %9, %cst_9 {dimension_numbers = #tpu.dot_dimension_numbers<[1], [0], [0], [1], [0, 0, 1, 1], [], []>} : vector<128x128xf32>, vector<128x1xf32>, vector<128x1xf32> -> vector<128x1xf32>
    %c0_10 = arith.constant 0 : index
    %c0_11 = arith.constant 0 : index
    %11 = vector.load %arg2[%c0_10, %c0_11] : memref<32x1xf32, #tpu.memory_space<vmem>>, vector<32x1xf32>
    %cst_12 = arith.constant dense<0.000000e+00> : vector<128x1xf32>
    %12 = tpu.matmul %2, %11, %cst_12 {dimension_numbers = #tpu.dot_dimension_numbers<[1], [0], [0], [1], [0, 0, 1, 1], [], []>} : vector<128x32xf32>, vector<32x1xf32>, vector<128x1xf32> -> vector<128x1xf32>
    %13 = arith.addf %12, %10 : vector<128x1xf32>
    %14 = vector.broadcast %4 : f32 to vector<128x1xf32>
    %15 = arith.addf %13, %14 : vector<128x1xf32>
    %c0_13 = arith.constant 0 : index
    %c0_14 = arith.constant 0 : index
    %16 = vector.load %arg7[%c0_13, %c0_14] : memref<128x1xf32, #tpu.memory_space<vmem>>, vector<128x1xf32>
    tpu.vector_store %arg7[%c0_13, %c0_14], %15 {strides = array<i32>} : memref<128x1xf32, #tpu.memory_space<vmem>>, vector<128x1xf32>,
    return
  }
  func.func @transform_0(%arg0: i32) -> (i32, i32) {
    %c0_i32 = arith.constant 0 : i32
    %c0_i32_0 = arith.constant 0 : i32
    return %arg0, %c0_i32 : i32, i32
  }
  func.func @transform_1(%arg0: i32) -> (i32, i32) {
    %c0_i32 = arith.constant 0 : i32
    %c0_i32_0 = arith.constant 0 : i32
    %c0_i32_1 = arith.constant 0 : i32
    return %c0_i32, %c0_i32_0 : i32, i32
  }
  func.func @transform_2(%arg0: i32) -> (i32, i32) {
    %c0_i32 = arith.constant 0 : i32
    %c0_i32_0 = arith.constant 0 : i32
    %c0_i32_1 = arith.constant 0 : i32
    return %c0_i32, %c0_i32_0 : i32, i32
  }
  func.func @transform_3(%arg0: i32) -> (i32, i32) {
    %c0_i32 = arith.constant 0 : i32
    %c0_i32_0 = arith.constant 0 : i32
    %c0_i32_1 = arith.constant 0 : i32
    return %c0_i32, %c0_i32_0 : i32, i32
  }
  func.func @transform_4(%arg0: i32) -> (i32, i32) {
    %c0_i32 = arith.constant 0 : i32
    %c0_i32_0 = arith.constant 0 : i32
    %c0_i32_1 = arith.constant 0 : i32
    return %c0_i32, %c0_i32_0 : i32, i32
  }
  func.func @transform_5(%arg0: i32) -> (i32, i32) {
    %c0_i32 = arith.constant 0 : i32
    %c0_i32_0 = arith.constant 0 : i32
    return %arg0, %c0_i32 : i32, i32
  }
  func.func @transform_6(%arg0: i32) -> (i32, i32) {
    %c0_i32 = arith.constant 0 : i32
    %c0_i32_0 = arith.constant 0 : i32
    return %arg0, %c0_i32 : i32, i32
  }
}

</mosaic_0001>

<llo_original>
// kernel: tpu_custom_call.1
$region0: #{tpu_custom_call.1}
  #allocation0 [shape = 'u32[]', space=smem, size = 0x4, offset = 0x4, fixed_abs, tag = 'smem constant byte address 0x4 - core index']
  #allocation1 [shape = 'u32[72,128]{1,0:T(1,128)}', space=vmem, size = 0x9000, scoped, tag = 'internal scratch']
  #allocation2 [shape = 'f32[1,1]{1,0:T(1,128)S(6)}', space=smem, size = 0x200, scoped, tag = 'scoped memory for tpu_custom_call.1']
  %s0 = inlined_call_operand.vmem [shape: bf16[256,32], index: 0, kind: input, shape index: {}]
  %s1 = inlined_call_operand.vmem [shape: f32[32,1], index: 1, kind: input, shape index: {}]
  %s2 = inlined_call_operand.<no memory space> [shape: f32[1,1], index: 2, kind: input, shape index: {}]
  %s3 = inlined_call_operand.vmem [shape: bf16[128,128], index: 3, kind: input, shape index: {}]
  %s4 = inlined_call_operand.vmem [shape: f32[128,1], index: 4, kind: input, shape index: {}]
  %s5 = inlined_call_operand.vmem [shape: bf16[256,128], index: 5, kind: input, shape index: {}]
  %s6 = inlined_call_operand.vmem [shape: f32[256,1], index: 6, kind: output, shape index: {}]
  %s7 = sld [smem:[#allocation0]]
  $region57: #{tpu_custom_call.1} parent=0
    _
  %s9 = ssub.s32 1, %s7
  %s10 = scalar_select 0, %s9, %s7
  %11 = sst [smem:[#allocation2]] %s2
  loop: start=0, step=1, limit=4
  $region2: #{tpu_custom_call.1} parent=0 // loop_pre_header
    _
  $region3: #{tpu_custom_call.1} parent=0 // loop_header
    %s13 = sphi 0, %s17
    %p14 = scmp.ge.s32.totalorder %s13, 4
    %s23 = sphi 0, %s25
    %s26 = sphi 0, %s23
    %s27 = sphi 0, %s26
    %s43 = sphi 0, %s27
    %s47 = sphi 0, %s47
    %s49 = sphi 0, %s47
    %s50 = sphi 0, %s49
    %s64 = sphi 0, %s50
    %s68 = sphi 0, %s68
    %s70 = sphi 0, %s68
    %s71 = sphi 0, %s70
    %s85 = sphi 0, %s71
    %s89 = sphi 0, %s89
    %s91 = sphi 0, %s89
    %s92 = sphi 0, %s91
    %s106 = sphi 0, %s92
    %s110 = sphi 0, %s110
    %s112 = sphi 0, %s110
    %s113 = sphi 0, %s112
    %s127 = sphi 0, %s113
    %s133 = sphi 0, %s135
    %s136 = sphi 0, %s133
    %s137 = sphi 0, %s136
    %s153 = sphi 0, %s137
    %s159 = sphi 0, %s161
    %s162 = sphi 0, %s159
    %s163 = sphi 0, %s162
    %s179 = sphi 0, %s163
  $region4: #{tpu_custom_call.1} parent=0 // loop_header_branch
    %16 = sbr.rel (%p14) target = $region8
  $region5: #{tpu_custom_call.1} parent=0 // loop_body
    %s18 = ssub.s32 %s13, 1
    %s19 = ssub.s32 %s13, 2
    %s20 = sadd.s32 %s13, 1
    %s21 = ssub.s32 %s13, %s20
    %p22 = scmp.eq.s32.totalorder %s21, 0
    %s24 = sadd.s32 %s23, 1
    %s25 = scalar_select %p22, %s23, %s24
    %p28 = pneg %p22
    %p29 = scmp.eq.s32.totalorder %s13, 1
    %p30 = por %p28, %p29
    %p31 = scmp.ne.s32.totalorder %s23, %s26
    %p32 = scmp.eq.s32.totalorder %s13, 0
    %p33 = por %p31, %p32
    %p34 = scmp.ne.s32.totalorder %s23, %s26
    %p35 = scmp.eq.s32.totalorder %s18, 1
    %p36 = por %p34, %p35
    %p37 = scmp.ne.s32.totalorder %s26, %s27
    %p38 = scmp.eq.s32.totalorder %s18, 0
    %p39 = por %p37, %p38
    %p40 = scmp.ne.s32.totalorder %s26, %s27
    %p41 = scmp.eq.s32.totalorder %s19, 1
    %p42 = por %p40, %p41
    %p44 = scmp.ne.s32.totalorder %s27, %s43
    %p45 = scmp.eq.s32.totalorder %s19, 0
    %p46 = por %p44, %p45
    %s48 = sadd.s32 %s47, 1
    %p51 = scmp.eq.s32.totalorder %s13, 1
    %p52 = scmp.ne.s32.totalorder %s47, %s49
    %p53 = scmp.eq.s32.totalorder %s13, 0
    %p54 = por %p52, %p53
    %p55 = scmp.ne.s32.totalorder %s47, %s49
    %p56 = scmp.eq.s32.totalorder %s18, 1
    %p57 = por %p55, %p56
    %p58 = scmp.ne.s32.totalorder %s49, %s50
    %p59 = scmp.eq.s32.totalorder %s18, 0
    %p60 = por %p58, %p59
    %p61 = scmp.ne.s32.totalorder %s49, %s50
    %p62 = scmp.eq.s32.totalorder %s19, 1
    %p63 = por %p61, %p62
    %p65 = scmp.ne.s32.totalorder %s50, %s64
    %p66 = scmp.eq.s32.totalorder %s19, 0
    %p67 = por %p65, %p66
    %s69 = sadd.s32 %s68, 1
    %p72 = scmp.eq.s32.totalorder %s13, 1
    %p73 = scmp.ne.s32.totalorder %s68, %s70
    %p74 = scmp.eq.s32.totalorder %s13, 0
    %p75 = por %p73, %p74
    %p76 = scmp.ne.s32.totalorder %s68, %s70
    %p77 = scmp.eq.s32.totalorder %s18, 1
    %p78 = por %p76, %p77
    %p79 = scmp.ne.s32.totalorder %s70, %s71
    %p80 = scmp.eq.s32.totalorder %s18, 0
    %p81 = por %p79, %p80
    %p82 = scmp.ne.s32.totalorder %s70, %s71
    %p83 = scmp.eq.s32.totalorder %s19, 1
    %p84 = por %p82, %p83
    %p86 = scmp.ne.s32.totalorder %s71, %s85
    %p87 = scmp.eq.s32.totalorder %s19, 0
    %p88 = por %p86, %p87
    %s90 = sadd.s32 %s89, 1
    %p93 = scmp.eq.s32.totalorder %s13, 1
    %p94 = scmp.ne.s32.totalorder %s89, %s91
    %p95 = scmp.eq.s32.totalorder %s13, 0
    %p96 = por %p94, %p95
    %p97 = scmp.ne.s32.totalorder %s89, %s91
    %p98 = scmp.eq.s32.totalorder %s18, 1
    %p99 = por %p97, %p98
    %p100 = scmp.ne.s32.totalorder %s91, %s92
    %p101 = scmp.eq.s32.totalorder %s18, 0
    %p102 = por %p100, %p101
    %p103 = scmp.ne.s32.totalorder %s91, %s92
    %p104 = scmp.eq.s32.totalorder %s19, 1
    %p105 = por %p103, %p104
    %p107 = scmp.ne.s32.totalorder %s92, %s106
    %p108 = scmp.eq.s32.totalorder %s19, 0
    %p109 = por %p107, %p108
    %s111 = sadd.s32 %s110, 1
    %p114 = scmp.eq.s32.totalorder %s13, 1
    %p115 = scmp.ne.s32.totalorder %s110, %s112
    %p116 = scmp.eq.s32.totalorder %s13, 0
    %p117 = por %p115, %p116
    %p118 = scmp.ne.s32.totalorder %s110, %s112
    %p119 = scmp.eq.s32.totalorder %s18, 1
    %p120 = por %p118, %p119
    %p121 = scmp.ne.s32.totalorder %s112, %s113
    %p122 = scmp.eq.s32.totalorder %s18, 0
    %p123 = por %p121, %p122
    %p124 = scmp.ne.s32.totalorder %s112, %s113
    %p125 = scmp.eq.s32.totalorder %s19, 1
    %p126 = por %p124, %p125
    %p128 = scmp.ne.s32.totalorder %s113, %s127
    %p129 = scmp.eq.s32.totalorder %s19, 0
    %p130 = por %p128, %p129
    %s131 = ssub.s32 %s13, %s20
    %p132 = scmp.eq.s32.totalorder %s131, 0
    %s134 = sadd.s32 %s133, 1
    %s135 = scalar_select %p132, %s133, %s134
    %p138 = pneg %p132
    %p139 = scmp.eq.s32.totalorder %s13, 1
    %p140 = por %p138, %p139
    %p141 = scmp.ne.s32.totalorder %s133, %s136
    %p142 = scmp.eq.s32.totalorder %s13, 0
    %p143 = por %p141, %p142
    %p144 = scmp.ne.s32.totalorder %s133, %s136
    %p145 = scmp.eq.s32.totalorder %s18, 1
    %p146 = por %p144, %p145
    %p147 = scmp.ne.s32.totalorder %s136, %s137
    %p148 = scmp.eq.s32.totalorder %s18, 0
    %p149 = por %p147, %p148
    %p150 = scmp.ne.s32.totalorder %s136, %s137
    %p151 = scmp.eq.s32.totalorder %s19, 1
    %p152 = por %p150, %p151
    %p154 = scmp.ne.s32.totalorder %s137, %s153
    %p155 = scmp.eq.s32.totalorder %s19, 0
    %p156 = por %p154, %p155
    %s157 = ssub.s32 %s13, %s20
    %p158 = scmp.eq.s32.totalorder %s157, 0
    %s160 = sadd.s32 %s159, 1
    %s161 = scalar_select %p158, %s159, %s160
    %p164 = pneg %p158
    %p165 = scmp.eq.s32.totalorder %s13, 1
    %p166 = por %p164, %p165
    %p167 = scmp.ne.s32.totalorder %s159, %s162
    %p168 = scmp.eq.s32.totalorder %s13, 0
    %p169 = por %p167, %p168
    %p170 = scmp.ne.s32.totalorder %s159, %s162
    %p171 = scmp.eq.s32.totalorder %s18, 1
    %p172 = por %p170, %p171
    %p173 = scmp.ne.s32.totalorder %s162, %s163
    %p174 = scmp.eq.s32.totalorder %s18, 0
    %p175 = por %p173, %p174
    %p176 = scmp.ne.s32.totalorder %s162, %s163
    %p177 = scmp.eq.s32.totalorder %s19, 1
    %p178 = por %p176, %p177
    %p180 = scmp.ne.s32.totalorder %s163, %s179
    %p181 = scmp.eq.s32.totalorder %s19, 0
    %p182 = por %p180, %p181
    %p183 = scmp.le.s32.totalorder 1, %s13
    %p184 = scmp.lt.s32.totalorder %s13, 3
    %p185 = pnand %p183, %p184
    %p186 = pneg %p185
    // Predicated region
    $region9: #{tpu_custom_call.1} parent=5 // pred_check
      _
    $region10: #{tpu_custom_call.1} parent=5 // pred_check_branch
      %188 = sbr.rel (%p185) target = $region12
    $region11: #{tpu_custom_call.1} parent=5 // pred_region
      %s189 = ssub.s32 %s13, 1
      // Predicated region
      $region13: #{tpu_custom_call.1} parent=11 // pred_check
        %p190 = pneg %p60
      $region14: #{tpu_custom_call.1} parent=11 // pred_check_branch
        %192 = sbr.rel (%p190) target = $region16
      $region15: #{tpu_custom_call.1} parent=11 // pred_region
        _
      $region16: #{tpu_custom_call.1} parent=11 // pred_fallthru
        _
      // Predicated region
      $region17: #{tpu_custom_call.1} parent=11 // pred_check
        %p193 = pneg %p81
      $region18: #{tpu_custom_call.1} parent=11 // pred_check_branch
        %195 = sbr.rel (%p193) target = $region20
      $region19: #{tpu_custom_call.1} parent=11 // pred_region
        _
      $region20: #{tpu_custom_call.1} parent=11 // pred_fallthru
        _
      // Predicated region
      $region21: #{tpu_custom_call.1} parent=11 // pred_check
        %p196 = pneg %p102
      $region22: #{tpu_custom_call.1} parent=11 // pred_check_branch
        %198 = sbr.rel (%p196) target = $region24
      $region23: #{tpu_custom_call.1} parent=11 // pred_region
        _
      $region24: #{tpu_custom_call.1} parent=11 // pred_fallthru
        _
      // Predicated region
      $region25: #{tpu_custom_call.1} parent=11 // pred_check
        %p199 = pneg %p123
      $region26: #{tpu_custom_call.1} parent=11 // pred_check_branch
        %201 = sbr.rel (%p199) target = $region28
      $region27: #{tpu_custom_call.1} parent=11 // pred_region
        _
      $region28: #{tpu_custom_call.1} parent=11 // pred_fallthru
        _
    $region12: #{tpu_custom_call.1} parent=5 // pred_fallthru
      _
    %p202 = scmp.lt.s32.totalorder %s13, 2
    // Predicated region
    $region29: #{tpu_custom_call.1} parent=5 // pred_check
      %p203 = pneg %p202
    $region30: #{tpu_custom_call.1} parent=5 // pred_check_branch
      %205 = sbr.rel (%p203) target = $region32
    $region31: #{tpu_custom_call.1} parent=5 // pred_region
      // Predicated region
      $region33: #{tpu_custom_call.1} parent=31 // pred_check
        %p206 = pneg %p33
      $region34: #{tpu_custom_call.1} parent=31 // pred_check_branch
        %208 = sbr.rel (%p206) target = $region36
      $region35: #{tpu_custom_call.1} parent=31 // pred_region
        %s209 = smul.u32 16, %s13
        %p210 = scmp.lt.s32.totalorder %s209, 31
        %s211 = scalar_select %p210, %s209, 31
        %s212 = smul.addr %s211, 4
        %s213 = scalar_lea.vmem %s0, %s212
        %s214 = smul.u32 16, %s13
      $region36: #{tpu_custom_call.1} parent=31 // pred_fallthru
        _
      // Predicated region
      $region37: #{tpu_custom_call.1} parent=31 // pred_check
        %p215 = pneg %p143
      $region38: #{tpu_custom_call.1} parent=31 // pred_check_branch
        %217 = sbr.rel (%p215) target = $region40
      $region39: #{tpu_custom_call.1} parent=31 // pred_region
        %s218 = smul.u32 16, %s13
        %p219 = scmp.lt.s32.totalorder %s218, 31
        %s220 = scalar_select %p219, %s218, 31
        %s221 = smul.addr %s220, 4
        %s222 = scalar_lea.vmem %s5, %s221
        %s223 = smul.u32 16, %s13
      $region40: #{tpu_custom_call.1} parent=31 // pred_fallthru
        _
    $region32: #{tpu_custom_call.1} parent=5 // pred_fallthru
      _
    %p224 = scmp.le.s32.totalorder 1, %s13
    %p225 = scmp.lt.s32.totalorder %s13, 3
    %p226 = pnand %p224, %p225
    %p227 = pneg %p226
    // Predicated region
    $region41: #{tpu_custom_call.1} parent=5 // pred_check
      _
    $region42: #{tpu_custom_call.1} parent=5 // pred_check_branch
      %229 = sbr.rel (%p226) target = $region44
    $region43: #{tpu_custom_call.1} parent=5 // pred_region
      %s230 = ssub.s32 %s13, 1
      %s231 = smul.u32 16, %s18
      %p232 = scmp.lt.s32.totalorder %s231, 31
      %s233 = scalar_select %p232, %s231, 31
      %s234 = smul.addr %s233, 4
      %s235 = scalar_lea.vmem %s0, %s234
      %p236 = pneg %p39
      %p237 = pneg %p36
      %p238 = pneg %p60
      %p239 = pneg %p57
      %p240 = pneg %p81
      %p241 = pneg %p78
      %p242 = pneg %p102
      %p243 = pneg %p99
      %p244 = pneg %p123
      %p245 = pneg %p120
      %s246 = smul.u32 16, %s18
      %p247 = scmp.lt.s32.totalorder %s246, 31
      %s248 = scalar_select %p247, %s246, 31
      %s249 = smul.addr %s248, 4
      %s250 = scalar_lea.vmem %s5, %s249
      %p251 = pneg %p149
      %p252 = pneg %p146
      %p253 = pneg %p175
      %p254 = pneg %p172
      %s255 = smul.u32 16, %s18
      %p256 = scmp.lt.s32.totalorder %s255, 31
      %s257 = scalar_select %p256, %s255, 31
      %s258 = smul.addr %s257, 8
      %s259 = scalar_lea.vmem %s6, %s258
      %s260 = smul.u32 16, %s18
      %p261 = scmp.lt.s32.totalorder %s260, 31
      %s262 = scalar_select %p261, %s260, 31
      %s263 = smul.addr %s262, 4
      %s264 = scalar_lea.vmem %s0, %s263
      %s265 = smul.u32 16, %s18
      %s266 = smul.u32 16, %s18
      %p267 = scmp.lt.s32.totalorder %s266, 31
      %s268 = scalar_select %p267, %s266, 31
      %s269 = smul.addr %s268, 4
      %s270 = scalar_lea.vmem %s5, %s269
      %s271 = smul.u32 16, %s18
      %s272 = smul.u32 16, %s18
      %p273 = scmp.lt.s32.totalorder %s272, 31
      %s274 = scalar_select %p273, %s272, 31
      %s275 = smul.addr %s274, 8
      %s276 = scalar_lea.vmem %s6, %s275
      %s277 = smul.u32 16, %s18
      %v278 = vld [vmem:[%s270] sm:$0xf]
      %v279 = vld [vmem:[%s270 + $0x4] sm:$0xf]
      %v280 = vld [vmem:[%s270 + $0x8] sm:$0xf]
      %v281 = vld [vmem:[%s270 + $0xc] sm:$0xf]
      %v282 = vld [vmem:[%s270 + $0x10] sm:$0xf]
      %v283 = vld [vmem:[%s270 + $0x14] sm:$0xf]
      %v284 = vld [vmem:[%s270 + $0x18] sm:$0xf]
      %v285 = vld [vmem:[%s270 + $0x1c] sm:$0xf]
      %v286 = vld [vmem:[%s270 + $0x20] sm:$0xf]
      %v287 = vld [vmem:[%s270 + $0x24] sm:$0xf]
      %v288 = vld [vmem:[%s270 + $0x28] sm:$0xf]
      %v289 = vld [vmem:[%s270 + $0x2c] sm:$0xf]
      %v290 = vld [vmem:[%s270 + $0x30] sm:$0xf]
      %v291 = vld [vmem:[%s270 + $0x34] sm:$0xf]
      %v292 = vld [vmem:[%s270 + $0x38] sm:$0xf]
      %v293 = vld [vmem:[%s270 + $0x3c] sm:$0xf]
      %v294 = vld [vmem:[%s264] sm:$0xf]
      %v295 = vld [vmem:[%s264 + $0x4] sm:$0xf]
      %v296 = vld [vmem:[%s264 + $0x8] sm:$0xf]
      %v297 = vld [vmem:[%s264 + $0xc] sm:$0xf]
      %v298 = vld [vmem:[%s264 + $0x10] sm:$0xf]
      %v299 = vld [vmem:[%s264 + $0x14] sm:$0xf]
      %v300 = vld [vmem:[%s264 + $0x18] sm:$0xf]
      %v301 = vld [vmem:[%s264 + $0x1c] sm:$0xf]
      %v302 = vld [vmem:[%s264 + $0x20] sm:$0xf]
      %v303 = vld [vmem:[%s264 + $0x24] sm:$0xf]
      %v304 = vld [vmem:[%s264 + $0x28] sm:$0xf]
      %v305 = vld [vmem:[%s264 + $0x2c] sm:$0xf]
      %v306 = vld [vmem:[%s264 + $0x30] sm:$0xf]
      %v307 = vld [vmem:[%s264 + $0x34] sm:$0xf]
      %v308 = vld [vmem:[%s264 + $0x38] sm:$0xf]
      %v309 = vld [vmem:[%s264 + $0x3c] sm:$0xf]
      %v310 = vunpack.c.l.bf16 %v294
      %v311 = vunpack.c.l.bf16 %v295
      %v312 = vunpack.c.l.bf16 %v296
      %v313 = vunpack.c.l.bf16 %v297
      %v314 = vunpack.c.l.bf16 %v298
      %v315 = vunpack.c.l.bf16 %v299
      %v316 = vunpack.c.l.bf16 %v300
      %v317 = vunpack.c.l.bf16 %v301
      %v318 = vunpack.c.l.bf16 %v302
      %v319 = vunpack.c.l.bf16 %v303
      %v320 = vunpack.c.l.bf16 %v304
      %v321 = vunpack.c.l.bf16 %v305
      %v322 = vunpack.c.l.bf16 %v306
      %v323 = vunpack.c.l.bf16 %v307
      %v324 = vunpack.c.l.bf16 %v308
      %v325 = vunpack.c.l.bf16 %v309
      %v326 = vunpack.c.l.bf16 %v278
      %v327 = vunpack.c.l.bf16 %v279
      %v328 = vunpack.c.l.bf16 %v280
      %v329 = vunpack.c.l.bf16 %v281
      %v330 = vunpack.c.l.bf16 %v282
      %v331 = vunpack.c.l.bf16 %v283
      %v332 = vunpack.c.l.bf16 %v284
      %v333 = vunpack.c.l.bf16 %v285
      %v334 = vunpack.c.l.bf16 %v286
      %v335 = vunpack.c.l.bf16 %v287
      %v336 = vunpack.c.l.bf16 %v288
      %v337 = vunpack.c.l.bf16 %v289
      %v338 = vunpack.c.l.bf16 %v290
      %v339 = vunpack.c.l.bf16 %v291
      %v340 = vunpack.c.l.bf16 %v292
      %v341 = vunpack.c.l.bf16 %v293
      %s342 = sld [smem:[#allocation2]]
      %v343 = vld [vmem:[%s3] sm:$0xf]
      %v344 = vld [vmem:[%s3 + $0x4] sm:$0xf]
      %v345 = vld [vmem:[%s3 + $0x8] sm:$0xf]
      %v346 = vld [vmem:[%s3 + $0xc] sm:$0xf]
      %v347 = vld [vmem:[%s3 + $0x10] sm:$0xf]
      %v348 = vld [vmem:[%s3 + $0x14] sm:$0xf]
      %v349 = vld [vmem:[%s3 + $0x18] sm:$0xf]
      %v350 = vld [vmem:[%s3 + $0x1c] sm:$0xf]
      %v351 = vld [vmem:[%s3 + $0x20] sm:$0xf]
      %v352 = vld [vmem:[%s3 + $0x24] sm:$0xf]
      %v353 = vld [vmem:[%s3 + $0x28] sm:$0xf]
      %v354 = vld [vmem:[%s3 + $0x2c] sm:$0xf]
      %v355 = vld [vmem:[%s3 + $0x30] sm:$0xf]
      %v356 = vld [vmem:[%s3 + $0x34] sm:$0xf]
      %v357 = vld [vmem:[%s3 + $0x38] sm:$0xf]
      %v358 = vld [vmem:[%s3 + $0x3c] sm:$0xf]
      %v375 = vunpack.c.l.b16 %v278
      %v376 = vunpack.c.l.b16 %v279
      %v377 = vunpack.c.l.b16 %v280
      %v378 = vunpack.c.l.b16 %v281
      %v379 = vunpack.c.l.b16 %v282
      %v380 = vunpack.c.l.b16 %v283
      %v381 = vunpack.c.l.b16 %v284
      %v382 = vunpack.c.l.b16 %v285
      %v383 = vunpack.c.l.b16 %v286
      %v384 = vunpack.c.l.b16 %v287
      %v385 = vunpack.c.l.b16 %v288
      %v386 = vunpack.c.l.b16 %v289
      %v387 = vunpack.c.l.b16 %v290
      %v388 = vunpack.c.l.b16 %v291
      %v389 = vunpack.c.l.b16 %v292
      %v390 = vunpack.c.l.b16 %v293
      %v391 = vpack.c.b16 %v376, %v375
      %v392 = vpack.c.b16 %v378, %v377
      %v393 = vpack.c.b16 %v380, %v379
      %v394 = vpack.c.b16 %v382, %v381
      %v395 = vpack.c.b16 %v384, %v383
      %v396 = vpack.c.b16 %v386, %v385
      %v397 = vpack.c.b16 %v388, %v387
      %v398 = vpack.c.b16 %v390, %v389
      %v423 = vunpack.c.l.b16 %v343
      %v424 = vunpack.c.l.b16 %v344
      %v425 = vunpack.c.l.b16 %v345
      %v426 = vunpack.c.l.b16 %v346
      %v427 = vunpack.c.l.b16 %v347
      %v428 = vunpack.c.l.b16 %v348
      %v429 = vunpack.c.l.b16 %v349
      %v430 = vunpack.c.l.b16 %v350
      %v431 = vunpack.c.l.b16 %v351
      %v432 = vunpack.c.l.b16 %v352
      %v433 = vunpack.c.l.b16 %v353
      %v434 = vunpack.c.l.b16 %v354
      %v435 = vunpack.c.l.b16 %v355
      %v436 = vunpack.c.l.b16 %v356
      %v437 = vunpack.c.l.b16 %v357
      %v438 = vunpack.c.l.b16 %v358
      %v439 = vpack.c.b16 %v424, %v423
      %v440 = vpack.c.b16 %v426, %v425
      %v441 = vpack.c.b16 %v428, %v427
      %v442 = vpack.c.b16 %v430, %v429
      %v443 = vpack.c.b16 %v432, %v431
      %v444 = vpack.c.b16 %v434, %v433
      %v445 = vpack.c.b16 %v436, %v435
      %v446 = vpack.c.b16 %v438, %v437
      %455 = vmatpush.bf16.msra.mxu0 %v446
      %456 = vmatpush.bf16.msra.mxu0 %v445
      %457 = vmatpush.bf16.msra.mxu0 %v444
      %458 = vmatpush.bf16.msra.mxu0 %v443
      %459 = vmatpush.bf16.msra.mxu0 %v442
      %460 = vmatpush.bf16.msra.mxu0 %v441
      %461 = vmatpush.bf16.msra.mxu0 %v440
      %462 = vmatpush.bf16.msra.mxu0 %v439
      %463 = vmatmul.bf16.gmra.mxu0 %v391
      %v464 = vpop.f32.mrf.mxu0
      %v465 = vadd.f32 0.0, %v464
      %v466 = vpop.f32.mrf.mxu0
      %v467 = vadd.f32 0.0, %v466
      %468 = vmatmul.bf16.gmra.mxu0 %v392
      %v469 = vpop.f32.mrf.mxu0
      %v470 = vadd.f32 0.0, %v469
      %v471 = vpop.f32.mrf.mxu0
      %v472 = vadd.f32 0.0, %v471
      %473 = vmatmul.bf16.gmra.mxu0 %v393
      %v474 = vpop.f32.mrf.mxu0
      %v475 = vadd.f32 0.0, %v474
      %v476 = vpop.f32.mrf.mxu0
      %v477 = vadd.f32 0.0, %v476
      %478 = vmatmul.bf16.gmra.mxu0 %v394
      %v479 = vpop.f32.mrf.mxu0
      %v480 = vadd.f32 0.0, %v479
      %v481 = vpop.f32.mrf.mxu0
      %v482 = vadd.f32 0.0, %v481
      %483 = vmatmul.bf16.gmra.mxu0 %v395
      %v484 = vpop.f32.mrf.mxu0
      %v485 = vadd.f32 0.0, %v484
      %v486 = vpop.f32.mrf.mxu0
      %v487 = vadd.f32 0.0, %v486
      %488 = vmatmul.bf16.gmra.mxu0 %v396
      %v489 = vpop.f32.mrf.mxu0
      %v490 = vadd.f32 0.0, %v489
      %v491 = vpop.f32.mrf.mxu0
      %v492 = vadd.f32 0.0, %v491
      %493 = vmatmul.bf16.gmra.mxu0 %v397
      %v494 = vpop.f32.mrf.mxu0
      %v495 = vadd.f32 0.0, %v494
      %v496 = vpop.f32.mrf.mxu0
      %v497 = vadd.f32 0.0, %v496
      %498 = vmatmul.bf16.gmra.mxu0 %v398
      %v499 = vpop.f32.mrf.mxu0
      %v500 = vadd.f32 0.0, %v499
      %v501 = vpop.f32.mrf.mxu0
      %v502 = vadd.f32 0.0, %v501
      %503 = vdwg.mxu0
      %v504 = vsub.f32 %v465, %v326
      %v505 = vsub.f32 %v467, %v327
      %v506 = vsub.f32 %v470, %v328
      %v507 = vsub.f32 %v472, %v329
      %v508 = vsub.f32 %v475, %v330
      %v509 = vsub.f32 %v477, %v331
      %v510 = vsub.f32 %v480, %v332
      %v511 = vsub.f32 %v482, %v333
      %v512 = vsub.f32 %v485, %v334
      %v513 = vsub.f32 %v487, %v335
      %v514 = vsub.f32 %v490, %v336
      %v515 = vsub.f32 %v492, %v337
      %v516 = vsub.f32 %v495, %v338
      %v517 = vsub.f32 %v497, %v339
      %v518 = vsub.f32 %v500, %v340
      %v519 = vsub.f32 %v502, %v341
      %v520 = vmul.f32 %v326, %v504
      %v521 = vmul.f32 %v327, %v505
      %v522 = vmul.f32 %v328, %v506
      %v523 = vmul.f32 %v329, %v507
      %v524 = vmul.f32 %v330, %v508
      %v525 = vmul.f32 %v331, %v509
      %v526 = vmul.f32 %v332, %v510
      %v527 = vmul.f32 %v333, %v511
      %v528 = vmul.f32 %v334, %v512
      %v529 = vmul.f32 %v335, %v513
      %v530 = vmul.f32 %v336, %v514
      %v531 = vmul.f32 %v337, %v515
      %v532 = vmul.f32 %v338, %v516
      %v533 = vmul.f32 %v339, %v517
      %v534 = vmul.f32 %v340, %v518
      %v535 = vmul.f32 %v341, %v519
      %v536 = vld [vmem:[%s4] sm:$0xff]
      %v537 = vld [vmem:[%s4 + $0x8] sm:$0xff]
      %v538 = vld [vmem:[%s4 + $0x10] sm:$0xff]
      %v539 = vld [vmem:[%s4 + $0x18] sm:$0xff]
      %v540 = vld [vmem:[%s4 + $0x20] sm:$0xff]
      %v541 = vld [vmem:[%s4 + $0x28] sm:$0xff]
      %v542 = vld [vmem:[%s4 + $0x30] sm:$0xff]
      %v543 = vld [vmem:[%s4 + $0x38] sm:$0xff]
      %v544 = vld [vmem:[%s4 + $0x40] sm:$0xff]
      %v545 = vld [vmem:[%s4 + $0x48] sm:$0xff]
      %v546 = vld [vmem:[%s4 + $0x50] sm:$0xff]
      %v547 = vld [vmem:[%s4 + $0x58] sm:$0xff]
      %v548 = vld [vmem:[%s4 + $0x60] sm:$0xff]
      %v549 = vld [vmem:[%s4 + $0x68] sm:$0xff]
      %v550 = vld [vmem:[%s4 + $0x70] sm:$0xff]
      %v551 = vld [vmem:[%s4 + $0x78] sm:$0xff]
      %552 = vmatpush.msra.mxu0 %v551
      %553 = vmatpush.msra.mxu0 %v550
      %554 = vmatpush.msra.mxu0 %v549
      %555 = vmatpush.msra.mxu0 %v548
      %556 = vmatpush.msra.mxu0 %v547
      %557 = vmatpush.msra.mxu0 %v546
      %558 = vmatpush.msra.mxu0 %v545
      %559 = vmatpush.msra.mxu0 %v544
      %560 = vmatpush.msra.mxu0 %v543
      %561 = vmatpush.msra.mxu0 %v542
      %562 = vmatpush.msra.mxu0 %v541
      %563 = vmatpush.msra.mxu0 %v540
      %564 = vmatpush.msra.mxu0 %v539
      %565 = vmatpush.msra.mxu0 %v538
      %566 = vmatpush.msra.mxu0 %v537
      %567 = vmatpush.msra.mxu0 %v536
      %568 = vmatmul.f32.gmra.mxu0 %v520
      %v569 = vpop.f32.mrf.mxu0
      %v570 = vadd.f32 0.0, %v569
      %571 = vmatmul.f32.gmra.mxu0 %v521
      %v572 = vpop.f32.mrf.mxu0
      %v573 = vadd.f32 0.0, %v572
      %574 = vmatmul.f32.gmra.mxu0 %v522
      %v575 = vpop.f32.mrf.mxu0
      %v576 = vadd.f32 0.0, %v575
      %577 = vmatmul.f32.gmra.mxu0 %v523
      %v578 = vpop.f32.mrf.mxu0
      %v579 = vadd.f32 0.0, %v578
      %580 = vmatmul.f32.gmra.mxu0 %v524
      %v581 = vpop.f32.mrf.mxu0
      %v582 = vadd.f32 0.0, %v581
      %583 = vmatmul.f32.gmra.mxu0 %v525
      %v584 = vpop.f32.mrf.mxu0
      %v585 = vadd.f32 0.0, %v584
      %586 = vmatmul.f32.gmra.mxu0 %v526
      %v587 = vpop.f32.mrf.mxu0
      %v588 = vadd.f32 0.0, %v587
      %589 = vmatmul.f32.gmra.mxu0 %v527
      %v590 = vpop.f32.mrf.mxu0
      %v591 = vadd.f32 0.0, %v590
      %592 = vmatmul.f32.gmra.mxu0 %v528
      %v593 = vpop.f32.mrf.mxu0
      %v594 = vadd.f32 0.0, %v593
      %595 = vmatmul.f32.gmra.mxu0 %v529
      %v596 = vpop.f32.mrf.mxu0
      %v597 = vadd.f32 0.0, %v596
      %598 = vmatmul.f32.gmra.mxu0 %v530
      %v599 = vpop.f32.mrf.mxu0
      %v600 = vadd.f32 0.0, %v599
      %601 = vmatmul.f32.gmra.mxu0 %v531
      %v602 = vpop.f32.mrf.mxu0
      %v603 = vadd.f32 0.0, %v602
      %604 = vmatmul.f32.gmra.mxu0 %v532
      %v605 = vpop.f32.mrf.mxu0
      %v606 = vadd.f32 0.0, %v605
      %607 = vmatmul.f32.gmra.mxu0 %v533
      %v608 = vpop.f32.mrf.mxu0
      %v609 = vadd.f32 0.0, %v608
      %610 = vmatmul.f32.gmra.mxu0 %v534
      %v611 = vpop.f32.mrf.mxu0
      %v612 = vadd.f32 0.0, %v611
      %613 = vmatmul.f32.gmra.mxu0 %v535
      %v614 = vpop.f32.mrf.mxu0
      %v615 = vadd.f32 0.0, %v614
      %616 = vdwg.mxu0
      %v617 = vld [vmem:[%s1] sm:$0xff]
      %v618 = vld [vmem:[%s1 + $0x8] sm:$0xff]
      %v619 = vld [vmem:[%s1 + $0x10] sm:$0xff]
      %v620 = vld [vmem:[%s1 + $0x18] sm:$0xff]
      %vm621 = vcmask 261120
      %v623 = vsel %vm621, %v310, 0
      %v626 = vsel %vm621, %v311, 0
      %v629 = vsel %vm621, %v312, 0
      %v632 = vsel %vm621, %v313, 0
      %v635 = vsel %vm621, %v314, 0
      %v638 = vsel %vm621, %v315, 0
      %v641 = vsel %vm621, %v316, 0
      %v644 = vsel %vm621, %v317, 0
      %v647 = vsel %vm621, %v318, 0
      %v650 = vsel %vm621, %v319, 0
      %v653 = vsel %vm621, %v320, 0
      %v656 = vsel %vm621, %v321, 0
      %v659 = vsel %vm621, %v322, 0
      %v662 = vsel %vm621, %v323, 0
      %v665 = vsel %vm621, %v324, 0
      %v668 = vsel %vm621, %v325, 0
      %670 = vmatpush.msra.mxu0 0.0
      %671 = vmatpush.msra.mxu0 0.0
      %672 = vmatpush.msra.mxu0 0.0
      %673 = vmatpush.msra.mxu0 0.0
      %674 = vmatpush.msra.mxu0 0.0
      %675 = vmatpush.msra.mxu0 0.0
      %676 = vmatpush.msra.mxu0 0.0
      %677 = vmatpush.msra.mxu0 0.0
      %678 = vmatpush.msra.mxu0 0.0
      %679 = vmatpush.msra.mxu0 0.0
      %680 = vmatpush.msra.mxu0 0.0
      %681 = vmatpush.msra.mxu0 0.0
      %682 = vmatpush.msra.mxu0 %v620
      %683 = vmatpush.msra.mxu0 %v619
      %684 = vmatpush.msra.mxu0 %v618
      %685 = vmatpush.msra.mxu0 %v617
      %686 = vmatmul.f32.gmra.mxu0 %v623
      %v687 = vpop.f32.mrf.mxu0
      %v688 = vadd.f32 %v570, %v687
      %689 = vmatmul.f32.gmra.mxu0 %v626
      %v690 = vpop.f32.mrf.mxu0
      %v691 = vadd.f32 %v573, %v690
      %692 = vmatmul.f32.gmra.mxu0 %v629
      %v693 = vpop.f32.mrf.mxu0
      %v694 = vadd.f32 %v576, %v693
      %695 = vmatmul.f32.gmra.mxu0 %v632
      %v696 = vpop.f32.mrf.mxu0
      %v697 = vadd.f32 %v579, %v696
      %698 = vmatmul.f32.gmra.mxu0 %v635
      %v699 = vpop.f32.mrf.mxu0
      %v700 = vadd.f32 %v582, %v699
      %701 = vmatmul.f32.gmra.mxu0 %v638
      %v702 = vpop.f32.mrf.mxu0
      %v703 = vadd.f32 %v585, %v702
      %704 = vmatmul.f32.gmra.mxu0 %v641
      %v705 = vpop.f32.mrf.mxu0
      %v706 = vadd.f32 %v588, %v705
      %707 = vmatmul.f32.gmra.mxu0 %v644
      %v708 = vpop.f32.mrf.mxu0
      %v709 = vadd.f32 %v591, %v708
      %710 = vmatmul.f32.gmra.mxu0 %v647
      %v711 = vpop.f32.mrf.mxu0
      %v712 = vadd.f32 %v594, %v711
      %713 = vmatmul.f32.gmra.mxu0 %v650
      %v714 = vpop.f32.mrf.mxu0
      %v715 = vadd.f32 %v597, %v714
      %716 = vmatmul.f32.gmra.mxu0 %v653
      %v717 = vpop.f32.mrf.mxu0
      %v718 = vadd.f32 %v600, %v717
      %719 = vmatmul.f32.gmra.mxu0 %v656
      %v720 = vpop.f32.mrf.mxu0
      %v721 = vadd.f32 %v603, %v720
      %722 = vmatmul.f32.gmra.mxu0 %v659
      %v723 = vpop.f32.mrf.mxu0
      %v724 = vadd.f32 %v606, %v723
      %725 = vmatmul.f32.gmra.mxu0 %v662
      %v726 = vpop.f32.mrf.mxu0
      %v727 = vadd.f32 %v609, %v726
      %728 = vmatmul.f32.gmra.mxu0 %v665
      %v729 = vpop.f32.mrf.mxu0
      %v730 = vadd.f32 %v612, %v729
      %731 = vmatmul.f32.gmra.mxu0 %v668
      %v732 = vpop.f32.mrf.mxu0
      %v733 = vadd.f32 %v615, %v732
      %734 = vdwg.mxu0
      %v735 = vstv %s342
      %v736 = vadd.f32 %v688, %v735
      %v737 = vadd.f32 %v691, %v735
      %v738 = vadd.f32 %v694, %v735
      %v739 = vadd.f32 %v697, %v735
      %v740 = vadd.f32 %v700, %v735
      %v741 = vadd.f32 %v703, %v735
      %v742 = vadd.f32 %v706, %v735
      %v743 = vadd.f32 %v709, %v735
      %v744 = vadd.f32 %v712, %v735
      %v745 = vadd.f32 %v715, %v735
      %v746 = vadd.f32 %v718, %v735
      %v747 = vadd.f32 %v721, %v735
      %v748 = vadd.f32 %v724, %v735
      %v749 = vadd.f32 %v727, %v735
      %v750 = vadd.f32 %v730, %v735
      %v751 = vadd.f32 %v733, %v735
      %vm752 = vcmask 7168
      %753 = vst.msk [vmem:[%s276] sm:$0xff] %vm752, %v736
      %754 = vst.msk [vmem:[%s276 + $0x8] sm:$0xff] %vm752, %v737
      %755 = vst.msk [vmem:[%s276 + $0x10] sm:$0xff] %vm752, %v738
      %756 = vst.msk [vmem:[%s276 + $0x18] sm:$0xff] %vm752, %v739
      %757 = vst.msk [vmem:[%s276 + $0x20] sm:$0xff] %vm752, %v740
      %758 = vst.msk [vmem:[%s276 + $0x28] sm:$0xff] %vm752, %v741
      %759 = vst.msk [vmem:[%s276 + $0x30] sm:$0xff] %vm752, %v742
      %760 = vst.msk [vmem:[%s276 + $0x38] sm:$0xff] %vm752, %v743
      %761 = vst.msk [vmem:[%s276 + $0x40] sm:$0xff] %vm752, %v744
      %762 = vst.msk [vmem:[%s276 + $0x48] sm:$0xff] %vm752, %v745
      %763 = vst.msk [vmem:[%s276 + $0x50] sm:$0xff] %vm752, %v746
      %764 = vst.msk [vmem:[%s276 + $0x58] sm:$0xff] %vm752, %v747
      %765 = vst.msk [vmem:[%s276 + $0x60] sm:$0xff] %vm752, %v748
      %766 = vst.msk [vmem:[%s276 + $0x68] sm:$0xff] %vm752, %v749
      %767 = vst.msk [vmem:[%s276 + $0x70] sm:$0xff] %vm752, %v750
      %768 = vst.msk [vmem:[%s276 + $0x78] sm:$0xff] %vm752, %v751
      %s769 = smul.u32 16, %s18
      %p770 = scmp.lt.s32.totalorder %s769, 31
      %s771 = scalar_select %p770, %s769, 31
      %s772 = smul.addr %s771, 8
      %s773 = scalar_lea.vmem %s6, %s772
      // Predicated region
      $region45: #{tpu_custom_call.1} parent=43 // pred_check
        %p774 = pneg %p172
      $region46: #{tpu_custom_call.1} parent=43 // pred_check_branch
        %776 = sbr.rel (%p774) target = $region48
      $region47: #{tpu_custom_call.1} parent=43 // pred_region
        %s777 = smul.u32 16, %s18
      $region48: #{tpu_custom_call.1} parent=43 // pred_fallthru
        _
    $region44: #{tpu_custom_call.1} parent=5 // pred_fallthru
      _
    %p778 = scmp.le.s32.totalorder 2, %s13
    // Predicated region
    $region49: #{tpu_custom_call.1} parent=5 // pred_check
      %p779 = pneg %p778
    $region50: #{tpu_custom_call.1} parent=5 // pred_check_branch
      %781 = sbr.rel (%p779) target = $region52
    $region51: #{tpu_custom_call.1} parent=5 // pred_region
      %s782 = ssub.s32 %s13, 2
      // Predicated region
      $region53: #{tpu_custom_call.1} parent=51 // pred_check
        %p783 = pneg %p178
      $region54: #{tpu_custom_call.1} parent=51 // pred_check_branch
        %785 = sbr.rel (%p783) target = $region56
      $region55: #{tpu_custom_call.1} parent=51 // pred_region
        %s786 = smul.u32 16, %s19
        %p787 = scmp.lt.s32.totalorder %s786, 31
        %s788 = scalar_select %p787, %s786, 31
        %s789 = smul.addr %s788, 8
        %s790 = scalar_lea.vmem %s6, %s789
      $region56: #{tpu_custom_call.1} parent=51 // pred_fallthru
        _
    $region52: #{tpu_custom_call.1} parent=5 // pred_fallthru
      _
  $region6: #{tpu_custom_call.1} parent=0 // loop_footer
    %s17 = sadd.s32 1, %s13
  $region7: #{tpu_custom_call.1} parent=0 // loop_footer_branch
    %12 = sbr.rel target = $region3
  $region8: #{tpu_custom_call.1} parent=0 // loop_exit
    _

</llo_original>
